<compile_context>
chip_gen: v6e
topology: v6e:2x2x1
jax: 0.10.0
libtpu: 0.0.40
codegen_flags: <defaults>
</compile_context>

<pallas_src>
import functools
import math

import jax
import jax.numpy as jnp
from jax import lax
from jax.experimental import pallas as pl
from jax.experimental.pallas import tpu as pltpu

ATTN_D = 128   # attn_d in the module
ATTN_R = 2     # attn_r in the module


def stc_attention_kernel(h_ref, aux_ref, w1_ref, w2t_ref, sel_ref, selt_ref,
                         o_ref, *, num_heads):
    """One grid step == one block of BT batch rows, flattened into BT*L rows.

    h_ref   : VMEM (BT*L, H)   input dtype (f32/bf16); cast to bf16 in-kernel
    aux_ref : VMEM (2, BT*L)   f32   row 0 = wt, row 1 = keep (1 - mask)
    w1_ref  : VMEM (H, D)      bf16  resident (constant index_map)
    w2t_ref : VMEM (8, D)      bf16  resident; rows 0..R-1 = w2^T, rest zero
    sel_ref : VMEM (BT, BT*L)  bf16  resident block-selection matrix
    selt_ref: VMEM (BT*L, BT)  bf16  resident, its transpose
    o_ref   : VMEM (BT, H)     f32   (middle output dim squeezed away)
    """
    f32 = jnp.float32
    bf16 = jnp.bfloat16

    # h arrives in its input dtype; the bf16 cast happens here (hidden under the
    # pipeline DMA of the next block) and feeds both MXU matmuls.
    h_bf = h_ref[...].astype(bf16)                                      # (BT*L, H)

    # attn_trans: Linear(H->D, no bias) -> Tanh -> Linear(D->R, no bias).
    u = jnp.tanh(jnp.dot(h_bf, w1_ref[...],
                         preferred_element_type=f32))                   # (BT*L, D)
    # Second Linear produced directly in row layout: s_t = w2^T @ u^T, an 'nt'
    # matmul (same shape class as q @ k^T).  Rows num_heads..7 are zero padding.
    s_t = lax.dot_general(w2t_ref[...], u.astype(bf16),
                          (((1,), (1,)), ((), ())),
                          preferred_element_type=f32)                    # (8, BT*L)

    # Softmax over the sequence dim per (batch row, head) == torch Softmax(dim=1).
    # The per-head max over the whole block is shift-invariant within each
    # group, so the result matches torch exactly.  Pad rows stay finite (== 1/L).
    g = jnp.max(s_t, axis=1, keepdims=True)                              # (8, 1)
    e = jnp.exp(s_t - g)                                                 # (8, BT*L)
    denom = jnp.dot(e.astype(bf16), selt_ref[...],
                    preferred_element_type=f32)                          # (8, BT)
    inv_row = jnp.dot(pl.reciprocal(denom, approx=True).astype(bf16),
                      sel_ref[...], preferred_element_type=f32)          # (8, BT*L)

    # mean over the attn_r heads: torch.mean(.permute(2, 0, 1), dim=0).
    a = e[0:num_heads, :] * inv_row[0:num_heads, :]                      # (R, BT*L)
    score = jnp.mean(a, axis=0, keepdims=True)                           # (1, BT*L)

    # Masked, distance-weighted softmax over the sequence dim (torch dim=2).
    # score*wt is in [0, 2], so exp() needs no max subtraction; masked positions
    # become exact zeros via the keep flag (== exp(-inf)).
    wt = aux_ref[0:1, :]                                                 # (1, BT*L)
    keep = aux_ref[1:2, :]                                               # (1, BT*L)
    p = jnp.exp(score * wt) * keep                                       # (1, BT*L)

    # bmm: fold the (unnormalized) softmax weights into the selection matrix and
    # do the whole block's weighted sum as one pure-bf16 MXU matmul; normalize
    # the tiny (BT, H) result afterwards in f32.
    sel_p = sel_ref[...] * p.astype(bf16)                                # (BT, BT*L)
    num = jnp.dot(sel_p, h_bf, preferred_element_type=f32)               # (BT, H)
    den = jnp.sum(sel_p.astype(f32), axis=1, keepdims=True)              # (BT, 1)
    o_ref[...] = (num * pl.reciprocal(den, approx=True)).astype(o_ref.dtype)


def _choose_block_b(B, L, H, itemsize):
    """Batch rows per grid step."""
    rows_for_mxu = 256           # fill the MXU M dim on v6e/v7x (>=128 on v5e)
    h_block_cap = 2 << 20        # per-buffer h bytes; x2 buffers + temporaries
                                 # stays inside every generation's default
                                 # scoped-VMEM limit (16 MiB v5e, 32 MiB v6e/v7x)
    bb = max(1, -(-rows_for_mxu // L))
    bb = min(bb, max(1, h_block_cap // max(L * H * itemsize, 1)))
    if B > 8:
        # keep >= 2 grid steps so v7x can shard the grid across its 2 TensorCores
        bb = min(bb, -(-B // 2))
    bb = max(8, ((bb + 7) // 8) * 8)           # sublane-aligned h block & output
    bb = min(bb, max(8, ((B + 7) // 8) * 8))   # never larger than the padded batch
    return bb


def stc_attention(h_context, attn_mask, char_lv_pos, w1, w2, *, block_b=None):
    """h_context (B, L, H), attn_mask (B, L) bool (True == masked),
    char_lv_pos (B,) int, w1 (H, 128), w2 (128, 2)  ->  (B, 1, H) float32."""
    B, L, H = h_context.shape
    D = w1.shape[1]
    R = w2.shape[1]
    pad_r = ((max(R, 1) + 7) // 8) * 8          # head rows padded to a sublane tile

    if block_b is None:
        block_b = _choose_block_b(B, L, H, h_context.dtype.itemsize)
    else:
        block_b = max(8, ((block_b + 7) // 8) * 8)
    n_blocks = -(-B // block_b)
    B_pad = n_blocks * block_b
    pad = B_pad - B

    # Padding rows: zero h, unmasked, pos 0 -> finite garbage that is sliced off.
    # NOTE: h keeps its input dtype here (no wrapper-side f32->bf16 pass over the
    # dominant HBM stream); the kernel casts to bf16 under the block DMA.
    h_p = h_context if pad == 0 else jnp.pad(h_context, ((0, pad), (0, 0), (0, 0)))
    mask_p = attn_mask.astype(jnp.float32)
    pos_p = char_lv_pos.astype(jnp.float32)
    if pad:
        mask_p = jnp.pad(mask_p, ((0, pad), (0, 0)))
        pos_p = jnp.pad(pos_p, ((0, pad),))

    h_flat = h_p.reshape(B_pad * L, H)          # layout-preserving reshape

    # Tiny lane-dense per-row auxiliaries (each B*L*4 bytes ~ 1/H of the h
    # stream): row 0 = distance weights wt = 2**(1-|l-pos|), row 1 = keep flag.
    l_idx = jnp.arange(L, dtype=jnp.float32)
    wt = jnp.exp2(1.0 - jnp.abs(l_idx[None, :] - pos_p[:, None]))        # (B_pad, L)
    keep = 1.0 - mask_p                                                  # (B_pad, L)
    aux = jnp.stack([wt.reshape(n_blocks, block_b * L),
                     keep.reshape(n_blocks, block_b * L)], axis=1)       # (nb, 2, BT*L)

    # Grid-invariant block-selection matrix (+ transpose), DMA'd once and kept
    # resident like the weights: sel[b, j] = 1 iff flattened row j is batch b.
    grp = jnp.arange(block_b * L, dtype=jnp.int32) // L
    sel = (grp[None, :] == jnp.arange(block_b, dtype=jnp.int32)[:, None]
           ).astype(jnp.bfloat16)                                        # (BT, BT*L)
    selt = sel.T                                                         # (BT*L, BT)

    w1_bf = w1.astype(jnp.bfloat16)                                      # (H, D)
    w2t_pad = jnp.pad(w2.T, ((0, pad_r - R), (0, 0))).astype(jnp.bfloat16)  # (8, D)

    grid_spec = pltpu.PrefetchScalarGridSpec(
        num_scalar_prefetch=0,
        grid=(n_blocks,),
        in_specs=[
            pl.BlockSpec((block_b * L, H), lambda b: (b, 0)),             # h
            pl.BlockSpec((None, 2, block_b * L), lambda b: (b, 0, 0)),    # aux rows
            pl.BlockSpec((H, D), lambda b: (0, 0)),                       # w1 (resident)
            pl.BlockSpec((pad_r, D), lambda b: (0, 0)),                   # w2^T (resident)
            pl.BlockSpec((block_b, block_b * L), lambda b: (0, 0)),       # sel (resident)
            pl.BlockSpec((block_b * L, block_b), lambda b: (0, 0)),       # sel^T (resident)
        ],
        out_specs=pl.BlockSpec((block_b, None, H), lambda b: (b, 0, 0)),
    )

    # Rough per-step VMEM estimate; only raise the scoped limit when a caller
    # asks for blocks bigger than the default limits comfortably allow.
    h_bytes = block_b * L * H * h_context.dtype.itemsize
    est = (2 * h_bytes + 2 * block_b * L * (D + H) * 4
           + 4 * block_b * block_b * L + (2 << 20))
    cp = dict(dimension_semantics=("parallel",))
    if est > (14 << 20):
        cp["vmem_limit_bytes"] = int(min(2 * est, 100 << 20))

    out = pl.pallas_call(
        functools.partial(stc_attention_kernel, num_heads=R),
        out_shape=jax.ShapeDtypeStruct((B_pad, 1, H), jnp.float32),
        grid_spec=grid_spec,
        compiler_params=pltpu.CompilerParams(**cp),
    )(h_flat, aux, w1_bf, w2t_pad, sel, selt)

    return out[:B]


if __name__ == "__main__":
    B, L, H = 12, 16, 32   # batch, seq_len, hidden_dim (small demo shapes)

    key = jax.random.PRNGKey(0)
    k1, k2, k3, k4, k5 = jax.random.split(key, 5)

    # Deterministic xavier_normal_ init (shapes transposed vs torch, so x @ w).
    std1 = math.sqrt(2.0 / (H + ATTN_D))
    std2 = math.sqrt(2.0 / (ATTN_D + ATTN_R))
    w1 = std1 * jax.random.normal(k1, (H, ATTN_D), dtype=jnp.float32)
    w2 = std2 * jax.random.normal(k2, (ATTN_D, ATTN_R), dtype=jnp.float32)

    h_context = jax.random.normal(k3, (B, L, H), dtype=jnp.float32)
    lengths = jax.random.randint(k4, (B,), 4, L + 1)
    attn_mask = jnp.arange(L)[None, :] >= lengths[:, None]     # (B, L), True == masked
    char_lv_pos = jax.random.randint(k5, (B,), 0, 4)

    out = stc_attention(h_context, attn_mask, char_lv_pos, w1, w2)
    out = jax.block_until_ready(out)

    # Pure-JAX float32 reference of the torch forward (use_wt=True path).
    def reference(h, mask, pos):
        u = jnp.tanh(h @ w1)                                   # (B, L, D)
        s = u @ w2                                             # (B, L, R)
        a = jax.nn.softmax(s, axis=1)                          # softmax over seq
        score = jnp.mean(a, axis=2)                            # (B, L)
        idx = jnp.arange(L, dtype=jnp.float32)[None, :]
        wt = 2.0 ** (1.0 - jnp.abs(idx - pos[:, None].astype(jnp.float32)))
        sp = jnp.where(mask, -jnp.inf, score * wt)
        sm = jax.nn.softmax(sp, axis=1)
        return jnp.einsum("bl,blh->bh", sm, h)[:, None, :]     # (B, 1, H)

    expected = reference(h_context, attn_mask, char_lv_pos)
    assert out.shape == (B, 1, H), out.shape
    # bf16 MXU operand feeds + approx reciprocals -> compare against the f32
    # reference with a correspondingly loose tolerance.
    assert jnp.allclose(out, expected, rtol=2e-2, atol=2e-2), (
        float(jnp.max(jnp.abs(out - expected))))

    print("KERNEL_OK")
</pallas_src>

<mosaic_0001>
module attributes {stable_mosaic.version = 11 : i64} {
  func.func @stc_attention_kernel(%arg0: i32, %arg1: memref<128x32xf32, #tpu.memory_space<vmem>>, %arg2: memref<1x2x128xf32, #tpu.memory_space<vmem>>, %arg3: memref<32x128xbf16, #tpu.memory_space<vmem>>, %arg4: memref<8x128xbf16, #tpu.memory_space<vmem>>, %arg5: memref<8x128xbf16, #tpu.memory_space<vmem>>, %arg6: memref<128x8xbf16, #tpu.memory_space<vmem>>, %arg7: memref<8x1x32xf32, #tpu.memory_space<vmem>>) attributes {dimension_semantics = [#tpu.dimension_semantics<parallel>], iteration_bounds = array<i64: 2>, scalar_prefetch = 0 : i64, scratch_operands = 0 : i64, tpu.core_type = #tpu.core_type<tc>, window_params = [{transform_indices = @transform_0, window_bounds = array<i64: 128, 32>}, {transform_indices = @transform_1, window_bounds = array<i64: 1, 2, 128>}, {pipeline_mode = #tpu.pipeline_mode<synchronous>, transform_indices = @transform_2, window_bounds = array<i64: 32, 128>}, {pipeline_mode = #tpu.pipeline_mode<synchronous>, transform_indices = @transform_3, window_bounds = array<i64: 8, 128>}, {pipeline_mode = #tpu.pipeline_mode<synchronous>, transform_indices = @transform_4, window_bounds = array<i64: 8, 128>}, {pipeline_mode = #tpu.pipeline_mode<synchronous>, transform_indices = @transform_5, window_bounds = array<i64: 128, 8>}, {transform_indices = @transform_6, window_bounds = array<i64: 8, 1, 32>}]} {
    %c0 = arith.constant 0 : index
    %c0_0 = arith.constant 0 : index
    %0 = vector.load %arg1[%c0, %c0_0] : memref<128x32xf32, #tpu.memory_space<vmem>>, vector<128x32xf32>
    %1 = arith.truncf %0 : vector<128x32xf32> to vector<128x32xbf16>
    %c0_1 = arith.constant 0 : index
    %c0_2 = arith.constant 0 : index
    %2 = vector.load %arg3[%c0_1, %c0_2] : memref<32x128xbf16, #tpu.memory_space<vmem>>, vector<32x128xbf16>
    %cst = arith.constant dense<0.000000e+00> : vector<128x128xf32>
    %3 = tpu.matmul %1, %2, %cst {dimension_numbers = #tpu.dot_dimension_numbers<[1], [0], [0], [1], [0, 0, 1, 1], [], []>} : vector<128x32xbf16>, vector<32x128xbf16>, vector<128x128xf32> -> vector<128x128xf32>
    %4 = math.tanh %3 : vector<128x128xf32>
    %c0_3 = arith.constant 0 : index
    %c0_4 = arith.constant 0 : index
    %5 = vector.load %arg4[%c0_3, %c0_4] : memref<8x128xbf16, #tpu.memory_space<vmem>>, vector<8x128xbf16>
    %6 = arith.truncf %4 : vector<128x128xf32> to vector<128x128xbf16>
    %cst_5 = arith.constant dense<0.000000e+00> : vector<8x128xf32>
    %7 = tpu.matmul %5, %6, %cst_5 {dimension_numbers = #tpu.dot_dimension_numbers<[1], [1], [0], [0], [0, 0, 1, 0], [], []>} : vector<8x128xbf16>, vector<128x128xbf16>, vector<8x128xf32> -> vector<8x128xf32>
    %cst_6 = arith.constant dense<0xFF800000> : vector<8xf32>
    %8 = vector.multi_reduction <maximumf>, %7, %cst_6 [1] : vector<8x128xf32> to vector<8xf32>
    %9 = vector.shape_cast %8 : vector<8xf32> to vector<8x1xf32>
    %10 = vector.broadcast %9 : vector<8x1xf32> to vector<8x128xf32>
    %11 = arith.subf %7, %10 : vector<8x128xf32>
    %12 = math.exp %11 : vector<8x128xf32>
    %13 = arith.truncf %12 : vector<8x128xf32> to vector<8x128xbf16>
    %c0_7 = arith.constant 0 : index
    %c0_8 = arith.constant 0 : index
    %14 = vector.load %arg6[%c0_7, %c0_8] : memref<128x8xbf16, #tpu.memory_space<vmem>>, vector<128x8xbf16>
    %cst_9 = arith.constant dense<0.000000e+00> : vector<8x8xf32>
    %15 = tpu.matmul %13, %14, %cst_9 {dimension_numbers = #tpu.dot_dimension_numbers<[1], [0], [0], [1], [0, 0, 1, 1], [], []>} : vector<8x128xbf16>, vector<128x8xbf16>, vector<8x8xf32> -> vector<8x8xf32>
    %16 = tpu.reciprocal %15 {approx = true} : vector<8x8xf32> -> vector<8x8xf32>
    %17 = arith.truncf %16 : vector<8x8xf32> to vector<8x8xbf16>
    %c0_10 = arith.constant 0 : index
    %c0_11 = arith.constant 0 : index
    %18 = vector.load %arg5[%c0_10, %c0_11] : memref<8x128xbf16, #tpu.memory_space<vmem>>, vector<8x128xbf16>
    %cst_12 = arith.constant dense<0.000000e+00> : vector<8x128xf32>
    %19 = tpu.matmul %17, %18, %cst_12 {dimension_numbers = #tpu.dot_dimension_numbers<[1], [0], [0], [1], [0, 0, 1, 1], [], []>} : vector<8x8xbf16>, vector<8x128xbf16>, vector<8x128xf32> -> vector<8x128xf32>
    %20 = vector.extract_strided_slice %12 {offsets = [0, 0], sizes = [2, 128], strides = [1, 1]} : vector<8x128xf32> to vector<2x128xf32>
    %21 = vector.extract_strided_slice %19 {offsets = [0, 0], sizes = [2, 128], strides = [1, 1]} : vector<8x128xf32> to vector<2x128xf32>
    %22 = arith.mulf %20, %21 : vector<2x128xf32>
    %cst_13 = arith.constant dense<0.000000e+00> : vector<128xf32>
    %23 = vector.multi_reduction <add>, %22, %cst_13 [0] : vector<2x128xf32> to vector<128xf32>
    %24 = vector.shape_cast %23 : vector<128xf32> to vector<1x128xf32>
    %cst_14 = arith.constant 2.000000e+00 : f32
    %25 = vector.broadcast %cst_14 : f32 to vector<1x128xf32>
    %26 = arith.divf %24, %25 : vector<1x128xf32>
    %c0_15 = arith.constant 0 : index
    %c0_16 = arith.constant 0 : index
    %c0_17 = arith.constant 0 : index
    %27 = vector.load %arg2[%c0_15, %c0_16, %c0_17] : memref<1x2x128xf32, #tpu.memory_space<vmem>>, vector<1x1x128xf32>
    %28 = vector.shape_cast %27 : vector<1x1x128xf32> to vector<1x128xf32>
    %c0_18 = arith.constant 0 : index
    %c1 = arith.constant 1 : index
    %c0_19 = arith.constant 0 : index
    %29 = vector.load %arg2[%c0_18, %c1, %c0_19] : memref<1x2x128xf32, #tpu.memory_space<vmem>>, vector<1x1x128xf32>
    %30 = vector.shape_cast %29 : vector<1x1x128xf32> to vector<1x128xf32>
    %31 = arith.mulf %26, %28 : vector<1x128xf32>
    %32 = math.exp %31 : vector<1x128xf32>
    %33 = arith.mulf %32, %30 : vector<1x128xf32>
    %c0_20 = arith.constant 0 : index
    %c0_21 = arith.constant 0 : index
    %34 = vector.load %arg5[%c0_20, %c0_21] : memref<8x128xbf16, #tpu.memory_space<vmem>>, vector<8x128xbf16>
    %35 = arith.truncf %33 : vector<1x128xf32> to vector<1x128xbf16>
    %36 = vector.broadcast %35 : vector<1x128xbf16> to vector<8x128xbf16>
    %37 = arith.mulf %34, %36 : vector<8x128xbf16>
    %cst_22 = arith.constant dense<0.000000e+00> : vector<8x32xf32>
    %38 = tpu.matmul %37, %1, %cst_22 {dimension_numbers = #tpu.dot_dimension_numbers<[1], [0], [0], [1], [0, 0, 1, 1], [], []>} : vector<8x128xbf16>, vector<128x32xbf16>, vector<8x32xf32> -> vector<8x32xf32>
    %39 = arith.extf %37 : vector<8x128xbf16> to vector<8x128xf32>
    %cst_23 = arith.constant dense<0.000000e+00> : vector<8xf32>
    %40 = vector.multi_reduction <add>, %39, %cst_23 [1] : vector<8x128xf32> to vector<8xf32>
    %41 = vector.shape_cast %40 : vector<8xf32> to vector<8x1xf32>
    %42 = tpu.reciprocal %41 {approx = true} : vector<8x1xf32> -> vector<8x1xf32>
    %43 = vector.broadcast %42 : vector<8x1xf32> to vector<8x32xf32>
    %44 = arith.mulf %38, %43 : vector<8x32xf32>
    %c0_24 = arith.constant 0 : index
    %c0_25 = arith.constant 0 : index
    %c0_26 = arith.constant 0 : index
    %45 = vector.load %arg7[%c0_24, %c0_25, %c0_26] : memref<8x1x32xf32, #tpu.memory_space<vmem>>, vector<8x1x32xf32>
    %46 = vector.shape_cast %45 : vector<8x1x32xf32> to vector<8x32xf32>
    %47 = vector.shape_cast %44 : vector<8x32xf32> to vector<8x1x32xf32>
    tpu.vector_store %arg7[%c0_24, %c0_25, %c0_26], %47 {strides = array<i32>} : memref<8x1x32xf32, #tpu.memory_space<vmem>>, vector<8x1x32xf32>,
    return
  }
  func.func @transform_0(%arg0: i32) -> (i32, i32) {
    %c0_i32 = arith.constant 0 : i32
    %c0_i32_0 = arith.constant 0 : i32
    return %arg0, %c0_i32 : i32, i32
  }
  func.func @transform_1(%arg0: i32) -> (i32, i32, i32) {
    %c0_i32 = arith.constant 0 : i32
    %c0_i32_0 = arith.constant 0 : i32
    %c0_i32_1 = arith.constant 0 : i32
    return %arg0, %c0_i32, %c0_i32_0 : i32, i32, i32
  }
  func.func @transform_2(%arg0: i32) -> (i32, i32) {
    %c0_i32 = arith.constant 0 : i32
    %c0_i32_0 = arith.constant 0 : i32
    %c0_i32_1 = arith.constant 0 : i32
    return %c0_i32, %c0_i32_0 : i32, i32
  }
  func.func @transform_3(%arg0: i32) -> (i32, i32) {
    %c0_i32 = arith.constant 0 : i32
    %c0_i32_0 = arith.constant 0 : i32
    %c0_i32_1 = arith.constant 0 : i32
    return %c0_i32, %c0_i32_0 : i32, i32
  }
  func.func @transform_4(%arg0: i32) -> (i32, i32) {
    %c0_i32 = arith.constant 0 : i32
    %c0_i32_0 = arith.constant 0 : i32
    %c0_i32_1 = arith.constant 0 : i32
    return %c0_i32, %c0_i32_0 : i32, i32
  }
  func.func @transform_5(%arg0: i32) -> (i32, i32) {
    %c0_i32 = arith.constant 0 : i32
    %c0_i32_0 = arith.constant 0 : i32
    %c0_i32_1 = arith.constant 0 : i32
    return %c0_i32, %c0_i32_0 : i32, i32
  }
  func.func @transform_6(%arg0: i32) -> (i32, i32, i32) {
    %c0_i32 = arith.constant 0 : i32
    %c0_i32_0 = arith.constant 0 : i32
    %c0_i32_1 = arith.constant 0 : i32
    return %arg0, %c0_i32, %c0_i32_0 : i32, i32, i32
  }
}

</mosaic_0001>

<llo_original>
// kernel: tpu_custom_call.1
$region0: #{tpu_custom_call.1}
  #allocation0 [shape = 'u32[]', space=smem, size = 0x4, offset = 0x4, fixed_abs, tag = 'smem constant byte address 0x4 - core index']
  #allocation1 [shape = 'u32[144,128]{1,0:T(1,128)}', space=vmem, size = 0x12000, scoped, tag = 'internal scratch']
  %s0 = inlined_call_operand.vmem [shape: f32[256,32], index: 0, kind: input, shape index: {}]
  %s1 = inlined_call_operand.vmem [shape: f32[2,2,128], index: 1, kind: input, shape index: {}]
  %s2 = inlined_call_operand.vmem [shape: bf16[32,128], index: 2, kind: input, shape index: {}]
  %s3 = inlined_call_operand.vmem [shape: bf16[8,128], index: 3, kind: input, shape index: {}]
  %s4 = inlined_call_operand.vmem [shape: bf16[8,128], index: 4, kind: input, shape index: {}]
  %s5 = inlined_call_operand.vmem [shape: bf16[128,8], index: 5, kind: input, shape index: {}]
  %s6 = inlined_call_operand.hbm [shape: f32[16,1,32], index: 6, kind: output, shape index: {}]
  %s7 = sld [smem:[#allocation0]]
  $region57: #{tpu_custom_call.1} parent=0
    _
  %s9 = ssub.s32 1, %s7
  %s10 = scalar_select 0, %s9, %s7
  $region1: #{tpu_custom_call.1} parent=0
    #allocation2 [shape = 'u8[8192]{0}', space=vmem, size = 0x2000, scoped, tag = 'output window, operand 0']
    #allocation3 [shape = 's32[2]{0}', space=sflag, size = 0x8, scoped, tag = 'scoped memory for tpu_custom_call.1']
    %11 = vsyncpa [#allocation3], 0
    %s12 = scalar_lea.sflag [#allocation3], 1
    %13 = vsyncpa %s12, 0
    loop: start=0, step=1, limit=4
    $region2: #{tpu_custom_call.1} parent=1 // loop_pre_header
      _
    $region3: #{tpu_custom_call.1} parent=1 // loop_header
      %s15 = sphi 0, %s19
      %p16 = scmp.ge.s32.totalorder %s15, 4
      %s25 = sphi 0, %s27
      %s28 = sphi 0, %s25
      %s29 = sphi 0, %s28
      %s45 = sphi 0, %s29
      %s51 = sphi 0, %s53
      %s54 = sphi 0, %s51
      %s55 = sphi 0, %s54
      %s71 = sphi 0, %s55
      %s75 = sphi 0, %s75
      %s77 = sphi 0, %s75
      %s78 = sphi 0, %s77
      %s92 = sphi 0, %s78
      %s96 = sphi 0, %s96
      %s98 = sphi 0, %s96
      %s99 = sphi 0, %s98
      %s113 = sphi 0, %s99
      %s117 = sphi 0, %s117
      %s119 = sphi 0, %s117
      %s120 = sphi 0, %s119
      %s134 = sphi 0, %s120
      %s138 = sphi 0, %s138
      %s140 = sphi 0, %s138
      %s141 = sphi 0, %s140
      %s155 = sphi 0, %s141
      %s161 = sphi 0, %s163
      %s164 = sphi 0, %s161
      %s165 = sphi 0, %s164
      %s181 = sphi 0, %s165
    $region4: #{tpu_custom_call.1} parent=1 // loop_header_branch
      %18 = sbr.rel (%p16) target = $region8
    $region5: #{tpu_custom_call.1} parent=1 // loop_body
      %s20 = ssub.s32 %s15, 1
      %s21 = ssub.s32 %s15, 2
      %s22 = sadd.s32 %s15, 1
      %s23 = ssub.s32 %s15, %s22
      %p24 = scmp.eq.s32.totalorder %s23, 0
      %s26 = sadd.s32 %s25, 1
      %s27 = scalar_select %p24, %s25, %s26
      %p30 = pneg %p24
      %p31 = scmp.eq.s32.totalorder %s15, 1
      %p32 = por %p30, %p31
      %p33 = scmp.ne.s32.totalorder %s25, %s28
      %p34 = scmp.eq.s32.totalorder %s15, 0
      %p35 = por %p33, %p34
      %p36 = scmp.ne.s32.totalorder %s25, %s28
      %p37 = scmp.eq.s32.totalorder %s20, 1
      %p38 = por %p36, %p37
      %p39 = scmp.ne.s32.totalorder %s28, %s29
      %p40 = scmp.eq.s32.totalorder %s20, 0
      %p41 = por %p39, %p40
      %p42 = scmp.ne.s32.totalorder %s28, %s29
      %p43 = scmp.eq.s32.totalorder %s21, 1
      %p44 = por %p42, %p43
      %p46 = scmp.ne.s32.totalorder %s29, %s45
      %p47 = scmp.eq.s32.totalorder %s21, 0
      %p48 = por %p46, %p47
      %s49 = ssub.s32 %s15, %s22
      %p50 = scmp.eq.s32.totalorder %s49, 0
      %s52 = sadd.s32 %s51, 1
      %s53 = scalar_select %p50, %s51, %s52
      %p56 = pneg %p50
      %p57 = scmp.eq.s32.totalorder %s15, 1
      %p58 = por %p56, %p57
      %p59 = scmp.ne.s32.totalorder %s51, %s54
      %p60 = scmp.eq.s32.totalorder %s15, 0
      %p61 = por %p59, %p60
      %p62 = scmp.ne.s32.totalorder %s51, %s54
      %p63 = scmp.eq.s32.totalorder %s20, 1
      %p64 = por %p62, %p63
      %p65 = scmp.ne.s32.totalorder %s54, %s55
      %p66 = scmp.eq.s32.totalorder %s20, 0
      %p67 = por %p65, %p66
      %p68 = scmp.ne.s32.totalorder %s54, %s55
      %p69 = scmp.eq.s32.totalorder %s21, 1
      %p70 = por %p68, %p69
      %p72 = scmp.ne.s32.totalorder %s55, %s71
      %p73 = scmp.eq.s32.totalorder %s21, 0
      %p74 = por %p72, %p73
      %s76 = sadd.s32 %s75, 1
      %p79 = scmp.eq.s32.totalorder %s15, 1
      %p80 = scmp.ne.s32.totalorder %s75, %s77
      %p81 = scmp.eq.s32.totalorder %s15, 0
      %p82 = por %p80, %p81
      %p83 = scmp.ne.s32.totalorder %s75, %s77
      %p84 = scmp.eq.s32.totalorder %s20, 1
      %p85 = por %p83, %p84
      %p86 = scmp.ne.s32.totalorder %s77, %s78
      %p87 = scmp.eq.s32.totalorder %s20, 0
      %p88 = por %p86, %p87
      %p89 = scmp.ne.s32.totalorder %s77, %s78
      %p90 = scmp.eq.s32.totalorder %s21, 1
      %p91 = por %p89, %p90
      %p93 = scmp.ne.s32.totalorder %s78, %s92
      %p94 = scmp.eq.s32.totalorder %s21, 0
      %p95 = por %p93, %p94
      %s97 = sadd.s32 %s96, 1
      %p100 = scmp.eq.s32.totalorder %s15, 1
      %p101 = scmp.ne.s32.totalorder %s96, %s98
      %p102 = scmp.eq.s32.totalorder %s15, 0
      %p103 = por %p101, %p102
      %p104 = scmp.ne.s32.totalorder %s96, %s98
      %p105 = scmp.eq.s32.totalorder %s20, 1
      %p106 = por %p104, %p105
      %p107 = scmp.ne.s32.totalorder %s98, %s99
      %p108 = scmp.eq.s32.totalorder %s20, 0
      %p109 = por %p107, %p108
      %p110 = scmp.ne.s32.totalorder %s98, %s99
      %p111 = scmp.eq.s32.totalorder %s21, 1
      %p112 = por %p110, %p111
      %p114 = scmp.ne.s32.totalorder %s99, %s113
      %p115 = scmp.eq.s32.totalorder %s21, 0
      %p116 = por %p114, %p115
      %s118 = sadd.s32 %s117, 1
      %p121 = scmp.eq.s32.totalorder %s15, 1
      %p122 = scmp.ne.s32.totalorder %s117, %s119
      %p123 = scmp.eq.s32.totalorder %s15, 0
      %p124 = por %p122, %p123
      %p125 = scmp.ne.s32.totalorder %s117, %s119
      %p126 = scmp.eq.s32.totalorder %s20, 1
      %p127 = por %p125, %p126
      %p128 = scmp.ne.s32.totalorder %s119, %s120
      %p129 = scmp.eq.s32.totalorder %s20, 0
      %p130 = por %p128, %p129
      %p131 = scmp.ne.s32.totalorder %s119, %s120
      %p132 = scmp.eq.s32.totalorder %s21, 1
      %p133 = por %p131, %p132
      %p135 = scmp.ne.s32.totalorder %s120, %s134
      %p136 = scmp.eq.s32.totalorder %s21, 0
      %p137 = por %p135, %p136
      %s139 = sadd.s32 %s138, 1
      %p142 = scmp.eq.s32.totalorder %s15, 1
      %p143 = scmp.ne.s32.totalorder %s138, %s140
      %p144 = scmp.eq.s32.totalorder %s15, 0
      %p145 = por %p143, %p144
      %p146 = scmp.ne.s32.totalorder %s138, %s140
      %p147 = scmp.eq.s32.totalorder %s20, 1
      %p148 = por %p146, %p147
      %p149 = scmp.ne.s32.totalorder %s140, %s141
      %p150 = scmp.eq.s32.totalorder %s20, 0
      %p151 = por %p149, %p150
      %p152 = scmp.ne.s32.totalorder %s140, %s141
      %p153 = scmp.eq.s32.totalorder %s21, 1
      %p154 = por %p152, %p153
      %p156 = scmp.ne.s32.totalorder %s141, %s155
      %p157 = scmp.eq.s32.totalorder %s21, 0
      %p158 = por %p156, %p157
      %s159 = ssub.s32 %s15, %s22
      %p160 = scmp.eq.s32.totalorder %s159, 0
      %s162 = sadd.s32 %s161, 1
      %s163 = scalar_select %p160, %s161, %s162
      %p166 = pneg %p160
      %p167 = scmp.eq.s32.totalorder %s15, 1
      %p168 = por %p166, %p167
      %p169 = scmp.ne.s32.totalorder %s161, %s164
      %p170 = scmp.eq.s32.totalorder %s15, 0
      %p171 = por %p169, %p170
      %p172 = scmp.ne.s32.totalorder %s161, %s164
      %p173 = scmp.eq.s32.totalorder %s20, 1
      %p174 = por %p172, %p173
      %p175 = scmp.ne.s32.totalorder %s164, %s165
      %p176 = scmp.eq.s32.totalorder %s20, 0
      %p177 = por %p175, %p176
      %p178 = scmp.ne.s32.totalorder %s164, %s165
      %p179 = scmp.eq.s32.totalorder %s21, 1
      %p180 = por %p178, %p179
      %p182 = scmp.ne.s32.totalorder %s165, %s181
      %p183 = scmp.eq.s32.totalorder %s21, 0
      %p184 = por %p182, %p183
      %p185 = scmp.le.s32.totalorder 1, %s15
      %p186 = scmp.lt.s32.totalorder %s15, 3
      %p187 = pnand %p185, %p186
      %p188 = pneg %p187
      // Predicated region
      $region9: #{tpu_custom_call.1} parent=5 // pred_check
        _
      $region10: #{tpu_custom_call.1} parent=5 // pred_check_branch
        %190 = sbr.rel (%p187) target = $region12
      $region11: #{tpu_custom_call.1} parent=5 // pred_region
        %s191 = ssub.s32 %s15, 1
        // Predicated region
        $region13: #{tpu_custom_call.1} parent=11 // pred_check
          %p192 = pneg %p88
        $region14: #{tpu_custom_call.1} parent=11 // pred_check_branch
          %194 = sbr.rel (%p192) target = $region16
        $region15: #{tpu_custom_call.1} parent=11 // pred_region
          _
        $region16: #{tpu_custom_call.1} parent=11 // pred_fallthru
          _
        // Predicated region
        $region17: #{tpu_custom_call.1} parent=11 // pred_check
          %p195 = pneg %p109
        $region18: #{tpu_custom_call.1} parent=11 // pred_check_branch
          %197 = sbr.rel (%p195) target = $region20
        $region19: #{tpu_custom_call.1} parent=11 // pred_region
          _
        $region20: #{tpu_custom_call.1} parent=11 // pred_fallthru
          _
        // Predicated region
        $region21: #{tpu_custom_call.1} parent=11 // pred_check
          %p198 = pneg %p130
        $region22: #{tpu_custom_call.1} parent=11 // pred_check_branch
          %200 = sbr.rel (%p198) target = $region24
        $region23: #{tpu_custom_call.1} parent=11 // pred_region
          _
        $region24: #{tpu_custom_call.1} parent=11 // pred_fallthru
          _
        // Predicated region
        $region25: #{tpu_custom_call.1} parent=11 // pred_check
          %p201 = pneg %p151
        $region26: #{tpu_custom_call.1} parent=11 // pred_check_branch
          %203 = sbr.rel (%p201) target = $region28
        $region27: #{tpu_custom_call.1} parent=11 // pred_region
          _
        $region28: #{tpu_custom_call.1} parent=11 // pred_fallthru
          _
      $region12: #{tpu_custom_call.1} parent=5 // pred_fallthru
        _
      %p204 = scmp.lt.s32.totalorder %s15, 2
      // Predicated region
      $region29: #{tpu_custom_call.1} parent=5 // pred_check
        %p205 = pneg %p204
      $region30: #{tpu_custom_call.1} parent=5 // pred_check_branch
        %207 = sbr.rel (%p205) target = $region32
      $region31: #{tpu_custom_call.1} parent=5 // pred_region
        // Predicated region
        $region33: #{tpu_custom_call.1} parent=31 // pred_check
          %p208 = pneg %p35
        $region34: #{tpu_custom_call.1} parent=31 // pred_check_branch
          %210 = sbr.rel (%p208) target = $region36
        $region35: #{tpu_custom_call.1} parent=31 // pred_region
          %s211 = smul.u32 16, %s15
          %p212 = scmp.lt.s32.totalorder %s211, 31
          %s213 = scalar_select %p212, %s211, 31
          %s214 = smul.addr %s213, 8
          %s215 = scalar_lea.vmem %s0, %s214
          %s216 = smul.u32 16, %s15
        $region36: #{tpu_custom_call.1} parent=31 // pred_fallthru
          _
        // Predicated region
        $region37: #{tpu_custom_call.1} parent=31 // pred_check
          %p217 = pneg %p61
        $region38: #{tpu_custom_call.1} parent=31 // pred_check_branch
          %219 = sbr.rel (%p217) target = $region40
        $region39: #{tpu_custom_call.1} parent=31 // pred_region
          %p220 = scmp.lt.s32.totalorder %s15, 1
          %s221 = scalar_select %p220, %s15, 1
          %s222 = smul.addr %s221, 2
          %s223 = scalar_lea.vmem %s1, %s222
        $region40: #{tpu_custom_call.1} parent=31 // pred_fallthru
          _
      $region32: #{tpu_custom_call.1} parent=5 // pred_fallthru
        _
      %p224 = scmp.le.s32.totalorder 1, %s15
      %p225 = scmp.lt.s32.totalorder %s15, 3
      %p226 = pnand %p224, %p225
      %p227 = pneg %p226
      // Predicated region
      $region41: #{tpu_custom_call.1} parent=5 // pred_check
        _
      $region42: #{tpu_custom_call.1} parent=5 // pred_check_branch
        %229 = sbr.rel (%p226) target = $region44
      $region43: #{tpu_custom_call.1} parent=5 // pred_region
        %s230 = ssub.s32 %s15, 1
        %s231 = smul.u32 16, %s20
        %p232 = scmp.lt.s32.totalorder %s231, 31
        %s233 = scalar_select %p232, %s231, 31
        %s234 = smul.addr %s233, 8
        %s235 = scalar_lea.vmem %s0, %s234
        %p236 = pneg %p41
        %p237 = pneg %p38
        %p238 = scmp.lt.s32.totalorder %s20, 1
        %s239 = scalar_select %p238, %s20, 1
        %s240 = smul.addr %s239, 2
        %s241 = scalar_lea.vmem %s1, %s240
        %p242 = pneg %p67
        %p243 = pneg %p64
        %p244 = pneg %p88
        %p245 = pneg %p85
        %p246 = pneg %p109
        %p247 = pneg %p106
        %p248 = pneg %p130
        %p249 = pneg %p127
        %p250 = pneg %p151
        %p251 = pneg %p148
        %p252 = pneg %p177
        %p253 = pneg %p174
        %s254 = sand.u32 %s164, 1
        %s255 = scalar_lea.sflag [#allocation3], %s254
        %s256 = sand.u32 %s164, 1
        %s257 = smul.addr %s256, 8
        %s258 = scalar_lea.vmem [#allocation2], %s257
        %s259 = smul.u32 16, %s20
        %p260 = scmp.lt.s32.totalorder %s259, 31
        %s261 = scalar_select %p260, %s259, 31
        %s262 = smul.addr %s261, 8
        %s263 = scalar_lea.vmem %s0, %s262
        %s264 = smul.u32 16, %s20
        %p265 = scmp.lt.s32.totalorder %s20, 1
        %s266 = scalar_select %p265, %s20, 1
        %s267 = smul.addr %s266, 2
        %s268 = scalar_lea.vmem %s1, %s267
        %s269 = smul.u32 8, %s20
        %v271 = vld [vmem:[%s263] sm:$0xff]
        %v272 = vld [vmem:[%s263 + $0x8] sm:$0xff]
        %v273 = vld [vmem:[%s263 + $0x10] sm:$0xff]
        %v274 = vld [vmem:[%s263 + $0x18] sm:$0xff]
        %v275 = vld [vmem:[%s263 + $0x20] sm:$0xff]
        %v276 = vld [vmem:[%s263 + $0x28] sm:$0xff]
        %v277 = vld [vmem:[%s263 + $0x30] sm:$0xff]
        %v278 = vld [vmem:[%s263 + $0x38] sm:$0xff]
        %v279 = vld [vmem:[%s263 + $0x40] sm:$0xff]
        %v280 = vld [vmem:[%s263 + $0x48] sm:$0xff]
        %v281 = vld [vmem:[%s263 + $0x50] sm:$0xff]
        %v282 = vld [vmem:[%s263 + $0x58] sm:$0xff]
        %v283 = vld [vmem:[%s263 + $0x60] sm:$0xff]
        %v284 = vld [vmem:[%s263 + $0x68] sm:$0xff]
        %v285 = vld [vmem:[%s263 + $0x70] sm:$0xff]
        %v286 = vld [vmem:[%s263 + $0x78] sm:$0xff]
        %v287 = vpack.c.bf16 %v272, %v271
        %v288 = vpack.c.bf16 %v274, %v273
        %v289 = vpack.c.bf16 %v276, %v275
        %v290 = vpack.c.bf16 %v278, %v277
        %v291 = vpack.c.bf16 %v280, %v279
        %v292 = vpack.c.bf16 %v282, %v281
        %v293 = vpack.c.bf16 %v284, %v283
        %v294 = vpack.c.bf16 %v286, %v285
        %v295 = vld [vmem:[%s2] sm:$0xf]
        %v296 = vld [vmem:[%s2 + $0x4] sm:$0xf]
        %v297 = vld [vmem:[%s2 + $0x8] sm:$0xf]
        %v298 = vld [vmem:[%s2 + $0xc] sm:$0xf]
        %v303 = vunpack.c.l.b16 %v295
        %v304 = vunpack.c.l.b16 %v296
        %v305 = vunpack.c.l.b16 %v297
        %v306 = vunpack.c.l.b16 %v298
        %v307 = vpack.c.b16 %v304, %v303
        %v308 = vpack.c.b16 %v306, %v305
        %vm311 = vcmask 261120
        %v313 = vsel %vm311, %v287, 0
        %v316 = vsel %vm311, %v288, 0
        %v319 = vsel %vm311, %v289, 0
        %v322 = vsel %vm311, %v290, 0
        %v325 = vsel %vm311, %v291, 0
        %v328 = vsel %vm311, %v292, 0
        %v331 = vsel %vm311, %v293, 0
        %v334 = vsel %vm311, %v294, 0
        %336 = vmatprep.subr.bf16.mxu0 0
        %337 = vmatpush1.bf16.msra.mxu0 0
        %338 = vmatprep.subr.bf16.mxu0 0
        %339 = vmatpush1.bf16.msra.mxu0 0
        %340 = vmatprep.subr.bf16.mxu0 0
        %341 = vmatpush1.bf16.msra.mxu0 0
        %342 = vmatprep.subr.bf16.mxu0 0
        %343 = vmatpush1.bf16.msra.mxu0 0
        %344 = vmatprep.subr.bf16.mxu0 0
        %345 = vmatpush1.bf16.msra.mxu0 0
        %346 = vmatprep.subr.bf16.mxu0 0
        %347 = vmatpush1.bf16.msra.mxu0 0
        %348 = vmatprep.subr.bf16.mxu0 0
        %349 = vmatpush1.bf16.msra.mxu0 %v308
        %350 = vmatprep.subr.bf16.mxu0 0
        %351 = vmatpush1.bf16.msra.mxu0 %v307
        %352 = vmatprep.subr.bf16.mxu0 0
        %353 = vmatpush2.bf16.msra.mxu0 0
        %354 = vmatprep.subr.bf16.mxu0 0
        %355 = vmatpush2.bf16.msra.mxu0 0
        %356 = vmatprep.subr.bf16.mxu0 0
        %357 = vmatpush2.bf16.msra.mxu0 0
        %358 = vmatprep.subr.bf16.mxu0 0
        %359 = vmatpush2.bf16.msra.mxu0 0
        %360 = vmatprep.subr.bf16.mxu0 0
        %361 = vmatpush2.bf16.msra.mxu0 0
        %362 = vmatprep.subr.bf16.mxu0 0
        %363 = vmatpush2.bf16.msra.mxu0 0
        %364 = vmatprep.subr.bf16.mxu0 0
        %365 = vmatpush2.bf16.msra.mxu0 0
        %366 = vmatprep.subr.bf16.mxu0 0
        %367 = vmatpush2.bf16.msra.mxu0 0
        %368 = vmatprep.mubr.bf16.mxu0 0
        %369 = vmatmul.mubr.bf16.gmra.mxu0 %v313
        %v370 = vpop.f32.mrf.mxu0
        %v371 = vadd.f32 0.0, %v370
        %v372 = vpop.f32.mrf.mxu0
        %v373 = vpop.f32.mrf.mxu0
        %v374 = vadd.f32 0.0, %v373
        %v375 = vpop.f32.mrf.mxu0
        %376 = vmatprep.mubr.bf16.mxu0 0
        %377 = vmatmul.mubr.bf16.gmra.mxu0 %v316
        %v378 = vpop.f32.mrf.mxu0
        %v379 = vadd.f32 0.0, %v378
        %v380 = vpop.f32.mrf.mxu0
        %v381 = vpop.f32.mrf.mxu0
        %v382 = vadd.f32 0.0, %v381
        %v383 = vpop.f32.mrf.mxu0
        %384 = vmatprep.mubr.bf16.mxu0 0
        %385 = vmatmul.mubr.bf16.gmra.mxu0 %v319
        %v386 = vpop.f32.mrf.mxu0
        %v387 = vadd.f32 0.0, %v386
        %v388 = vpop.f32.mrf.mxu0
        %v389 = vpop.f32.mrf.mxu0
        %v390 = vadd.f32 0.0, %v389
        %v391 = vpop.f32.mrf.mxu0
        %392 = vmatprep.mubr.bf16.mxu0 0
        %393 = vmatmul.mubr.bf16.gmra.mxu0 %v322
        %v394 = vpop.f32.mrf.mxu0
        %v395 = vadd.f32 0.0, %v394
        %v396 = vpop.f32.mrf.mxu0
        %v397 = vpop.f32.mrf.mxu0
        %v398 = vadd.f32 0.0, %v397
        %v399 = vpop.f32.mrf.mxu0
        %400 = vmatprep.mubr.bf16.mxu0 0
        %401 = vmatmul.mubr.bf16.gmra.mxu0 %v325
        %v402 = vpop.f32.mrf.mxu0
        %v403 = vadd.f32 0.0, %v402
        %v404 = vpop.f32.mrf.mxu0
        %v405 = vpop.f32.mrf.mxu0
        %v406 = vadd.f32 0.0, %v405
        %v407 = vpop.f32.mrf.mxu0
        %408 = vmatprep.mubr.bf16.mxu0 0
        %409 = vmatmul.mubr.bf16.gmra.mxu0 %v328
        %v410 = vpop.f32.mrf.mxu0
        %v411 = vadd.f32 0.0, %v410
        %v412 = vpop.f32.mrf.mxu0
        %v413 = vpop.f32.mrf.mxu0
        %v414 = vadd.f32 0.0, %v413
        %v415 = vpop.f32.mrf.mxu0
        %416 = vmatprep.mubr.bf16.mxu0 0
        %417 = vmatmul.mubr.bf16.gmra.mxu0 %v331
        %v418 = vpop.f32.mrf.mxu0
        %v419 = vadd.f32 0.0, %v418
        %v420 = vpop.f32.mrf.mxu0
        %v421 = vpop.f32.mrf.mxu0
        %v422 = vadd.f32 0.0, %v421
        %v423 = vpop.f32.mrf.mxu0
        %424 = vmatprep.mubr.bf16.mxu0 0
        %425 = vmatmul.mubr.bf16.gmra.mxu0 %v334
        %v426 = vpop.f32.mrf.mxu0
        %v427 = vadd.f32 0.0, %v426
        %v428 = vpop.f32.mrf.mxu0
        %v429 = vpop.f32.mrf.mxu0
        %v430 = vadd.f32 0.0, %v429
        %v431 = vpop.f32.mrf.mxu0
        %432 = vdwg.mxu0
        %v433 = vtanh.pop %v371
        %v434 = vtanh.pop %v374
        %v435 = vtanh.pop %v379
        %v436 = vtanh.pop %v382
        %v437 = vtanh.pop %v387
        %v438 = vtanh.pop %v390
        %v439 = vtanh.pop %v395
        %v440 = vtanh.pop %v398
        %v441 = vtanh.pop %v403
        %v442 = vtanh.pop %v406
        %v443 = vtanh.pop %v411
        %v444 = vtanh.pop %v414
        %v445 = vtanh.pop %v419
        %v446 = vtanh.pop %v422
        %v447 = vtanh.pop %v427
        %v448 = vtanh.pop %v430
        %v449 = vld [vmem:[%s3] sm:$0xf]
        %v450 = vpack.c.bf16 %v434, %v433
        %v451 = vpack.c.bf16 %v436, %v435
        %v452 = vpack.c.bf16 %v438, %v437
        %v453 = vpack.c.bf16 %v440, %v439
        %v454 = vpack.c.bf16 %v442, %v441
        %v455 = vpack.c.bf16 %v444, %v443
        %v456 = vpack.c.bf16 %v446, %v445
        %v457 = vpack.c.bf16 %v448, %v447
        %458 = vmatprep.subr.bf16.mxu0 0
        %459 = vmatpush1.bf16.xpose.msra.mxu0 %v457
        %460 = vmatprep.subr.bf16.mxu0 0
        %461 = vmatpush1.bf16.xpose.msra.mxu0 %v456
        %462 = vmatprep.subr.bf16.mxu0 0
        %463 = vmatpush1.bf16.xpose.msra.mxu0 %v455
        %464 = vmatprep.subr.bf16.mxu0 0
        %465 = vmatpush1.bf16.xpose.msra.mxu0 %v454
        %466 = vmatprep.subr.bf16.mxu0 0
        %467 = vmatpush1.bf16.xpose.msra.mxu0 %v453
        %468 = vmatprep.subr.bf16.mxu0 0
        %469 = vmatpush1.bf16.xpose.msra.mxu0 %v452
        %470 = vmatprep.subr.bf16.mxu0 0
        %471 = vmatpush1.bf16.xpose.msra.mxu0 %v451
        %472 = vmatprep.subr.bf16.mxu0 0
        %473 = vmatpush1.bf16.xpose.msra.mxu0 %v450
        %474 = vmatprep.subr.bf16.mxu0 0
        %475 = vmatpush2.bf16.xpose.msra.mxu0 0
        %476 = vmatprep.subr.bf16.mxu0 0
        %477 = vmatpush2.bf16.xpose.msra.mxu0 0
        %478 = vmatprep.subr.bf16.mxu0 0
        %479 = vmatpush2.bf16.xpose.msra.mxu0 0
        %480 = vmatprep.subr.bf16.mxu0 0
        %481 = vmatpush2.bf16.xpose.msra.mxu0 0
        %482 = vmatprep.subr.bf16.mxu0 0
        %483 = vmatpush2.bf16.xpose.msra.mxu0 0
        %484 = vmatprep.subr.bf16.mxu0 0
        %485 = vmatpush2.bf16.xpose.msra.mxu0 0
        %486 = vmatprep.subr.bf16.mxu0 0
        %487 = vmatpush2.bf16.xpose.msra.mxu0 0
        %488 = vmatprep.subr.bf16.mxu0 0
        %489 = vmatpush2.bf16.xpose.msra.mxu0 0
        %490 = vmatprep.mubr.bf16.mxu0 0
        %491 = vmatmul.mubr.bf16.gmra.mxu0 %v449
        %v492 = vpop.f32.mrf.mxu0
        %v493 = vadd.f32 0.0, %v492
        %v494 = vpop.f32.mrf.mxu0
        %v495 = vpop.f32.mrf.mxu0
        %v496 = vpop.f32.mrf.mxu0
        %497 = vdwg.mxu0
        %498 = vmax.xlane.f32.xlu0 %v493
        %v499 = vpop.xlane.xlu0 %498
        %v500 = vsub.f32 %v493, %v499
        %v501 = vmul.f32 %v500, 1.442695
        %v502 = vpow.pop %v501
        %v503 = vpack.c.bf16 %v502, %v502
        %v504 = vld [vmem:[%s5] sm:$0xf]
        %v505 = vld [vmem:[%s5 + $0x4] sm:$0xf]
        %v506 = vld [vmem:[%s5 + $0x8] sm:$0xf]
        %v507 = vld [vmem:[%s5 + $0xc] sm:$0xf]
        %v508 = vld [vmem:[%s5 + $0x10] sm:$0xf]
        %v509 = vld [vmem:[%s5 + $0x14] sm:$0xf]
        %v510 = vld [vmem:[%s5 + $0x18] sm:$0xf]
        %v511 = vld [vmem:[%s5 + $0x1c] sm:$0xf]
        %v512 = vld [vmem:[%s5 + $0x20] sm:$0xf]
        %v513 = vld [vmem:[%s5 + $0x24] sm:$0xf]
        %v514 = vld [vmem:[%s5 + $0x28] sm:$0xf]
        %v515 = vld [vmem:[%s5 + $0x2c] sm:$0xf]
        %v516 = vld [vmem:[%s5 + $0x30] sm:$0xf]
        %v517 = vld [vmem:[%s5 + $0x34] sm:$0xf]
        %v518 = vld [vmem:[%s5 + $0x38] sm:$0xf]
        %v519 = vld [vmem:[%s5 + $0x3c] sm:$0xf]
        %v536 = vunpack.c.l.b16 %v504
        %v537 = vunpack.c.l.b16 %v505
        %v538 = vunpack.c.l.b16 %v506
        %v539 = vunpack.c.l.b16 %v507
        %v540 = vunpack.c.l.b16 %v508
        %v541 = vunpack.c.l.b16 %v509
        %v542 = vunpack.c.l.b16 %v510
        %v543 = vunpack.c.l.b16 %v511
        %v544 = vunpack.c.l.b16 %v512
        %v545 = vunpack.c.l.b16 %v513
        %v546 = vunpack.c.l.b16 %v514
        %v547 = vunpack.c.l.b16 %v515
        %v548 = vunpack.c.l.b16 %v516
        %v549 = vunpack.c.l.b16 %v517
        %v550 = vunpack.c.l.b16 %v518
        %v551 = vunpack.c.l.b16 %v519
        %v552 = vpack.c.b16 %v537, %v536
        %v553 = vpack.c.b16 %v539, %v538
        %v554 = vpack.c.b16 %v541, %v540
        %v555 = vpack.c.b16 %v543, %v542
        %v556 = vpack.c.b16 %v545, %v544
        %v557 = vpack.c.b16 %v547, %v546
        %v558 = vpack.c.b16 %v549, %v548
        %v559 = vpack.c.b16 %v551, %v550
        %568 = vmatprep.subr.bf16.mxu0 0
        %569 = vmatpush1.bf16.msra.mxu0 %v559
        %570 = vmatprep.subr.bf16.mxu0 0
        %571 = vmatpush1.bf16.msra.mxu0 %v558
        %572 = vmatprep.subr.bf16.mxu0 0
        %573 = vmatpush1.bf16.msra.mxu0 %v557
        %574 = vmatprep.subr.bf16.mxu0 0
        %575 = vmatpush1.bf16.msra.mxu0 %v556
        %576 = vmatprep.subr.bf16.mxu0 0
        %577 = vmatpush1.bf16.msra.mxu0 %v555
        %578 = vmatprep.subr.bf16.mxu0 0
        %579 = vmatpush1.bf16.msra.mxu0 %v554
        %580 = vmatprep.subr.bf16.mxu0 0
        %581 = vmatpush1.bf16.msra.mxu0 %v553
        %582 = vmatprep.subr.bf16.mxu0 0
        %583 = vmatpush1.bf16.msra.mxu0 %v552
        %584 = vmatprep.subr.bf16.mxu0 0
        %585 = vmatpush2.bf16.msra.mxu0 0
        %586 = vmatprep.subr.bf16.mxu0 0
        %587 = vmatpush2.bf16.msra.mxu0 0
        %588 = vmatprep.subr.bf16.mxu0 0
        %589 = vmatpush2.bf16.msra.mxu0 0
        %590 = vmatprep.subr.bf16.mxu0 0
        %591 = vmatpush2.bf16.msra.mxu0 0
        %592 = vmatprep.subr.bf16.mxu0 0
        %593 = vmatpush2.bf16.msra.mxu0 0
        %594 = vmatprep.subr.bf16.mxu0 0
        %595 = vmatpush2.bf16.msra.mxu0 0
        %596 = vmatprep.subr.bf16.mxu0 0
        %597 = vmatpush2.bf16.msra.mxu0 0
        %598 = vmatprep.subr.bf16.mxu0 0
        %599 = vmatpush2.bf16.msra.mxu0 0
        %600 = vmatprep.mubr.bf16.mxu0 0
        %601 = vmatmul.mubr.bf16.gmra.mxu0 %v503
        %v602 = vpop.f32.mrf.mxu0
        %v603 = vadd.f32 0.0, %v602
        %v604 = vpop.f32.mrf.mxu0
        %v605 = vpop.f32.mrf.mxu0
        %v606 = vpop.f32.mrf.mxu0
        %607 = vdwg.mxu0
        %v608 = vrcp.pop %v603
        %v609 = vpack.c.bf16 %v608, %v608
        %v610 = vld [vmem:[%s4] sm:$0xf]
        %vm611 = vcmask 64512
        %v613 = vsel %vm611, %v609, 0
        %vm615 = vcmask 1043456
        %v617 = vsel %vm615, %v610, 0
        %619 = vmatprep.subr.bf16.mxu0 0
        %620 = vmatpush1.bf16.msra.mxu0 0
        %621 = vmatprep.subr.bf16.mxu0 0
        %622 = vmatpush1.bf16.msra.mxu0 0
        %623 = vmatprep.subr.bf16.mxu0 0
        %624 = vmatpush1.bf16.msra.mxu0 0
        %625 = vmatprep.subr.bf16.mxu0 0
        %626 = vmatpush1.bf16.msra.mxu0 0
        %627 = vmatprep.subr.bf16.mxu0 0
        %628 = vmatpush1.bf16.msra.mxu0 0
        %629 = vmatprep.subr.bf16.mxu0 0
        %630 = vmatpush1.bf16.msra.mxu0 0
        %631 = vmatprep.subr.bf16.mxu0 0
        %632 = vmatpush1.bf16.msra.mxu0 0
        %633 = vmatprep.subr.bf16.mxu0 0
        %634 = vmatpush1.bf16.msra.mxu0 %v617
        %635 = vmatprep.subr.bf16.mxu0 0
        %636 = vmatpush2.bf16.msra.mxu0 0
        %637 = vmatprep.subr.bf16.mxu0 0
        %638 = vmatpush2.bf16.msra.mxu0 0
        %639 = vmatprep.subr.bf16.mxu0 0
        %640 = vmatpush2.bf16.msra.mxu0 0
        %641 = vmatprep.subr.bf16.mxu0 0
        %642 = vmatpush2.bf16.msra.mxu0 0
        %643 = vmatprep.subr.bf16.mxu0 0
        %644 = vmatpush2.bf16.msra.mxu0 0
        %645 = vmatprep.subr.bf16.mxu0 0
        %646 = vmatpush2.bf16.msra.mxu0 0
        %647 = vmatprep.subr.bf16.mxu0 0
        %648 = vmatpush2.bf16.msra.mxu0 0
        %649 = vmatprep.subr.bf16.mxu0 0
        %650 = vmatpush2.bf16.msra.mxu0 0
        %651 = vmatprep.mubr.bf16.mxu0 0
        %652 = vmatmul.mubr.bf16.gmra.mxu0 %v613
        %v653 = vpop.f32.mrf.mxu0
        %v654 = vadd.f32 0.0, %v653
        %v655 = vpop.f32.mrf.mxu0
        %v656 = vpop.f32.mrf.mxu0
        %v657 = vpop.f32.mrf.mxu0
        %658 = vdwg.mxu0
        %v659 = vmul.f32 %v502, %v654
        %vm660 = vcmask 1041408
        %v661 = vsel %vm660, %v659, 0.0
        %v662 = vrot.slane %v661, 4
        %v663 = vadd.f32 %v661, %v662
        %v664 = vrot.slane %v663, 2
        %v665 = vadd.f32 %v663, %v664
        %v666 = vrot.slane %v665, 1
        %v667 = vadd.f32 %v665, %v666
        %v668 = vrcp.pop 2.0
        %v669 = vmul.f32 %v667, %v668
        %v670 = vld [vmem:[%s268] sm:$0x1]
        %v671 = vld [vmem:[%s268 + $0x1] sm:$0x1]
        %v672 = vmul.f32 %v669, %v670
        %v673 = vmul.f32 %v672, 1.442695
        %v674 = vpow.pop %v673
        %v675 = vmul.f32 %v674, %v671
        %v676 = vpack.c.bf16 %v675, %v675
        %v678 = vpack.i.b16 %v676, %v676
        %v680 = vlaneseq
        %v681 = vshrl.u32 %v680, 7
        %v682 = vsub.s32 0, %v681
        %v683 = vrot.slane %v678, %v682
        %v684 = vmul.bf16 %v610, %v683
        %685 = vmatprep.subr.bf16.mxu0 0
        %686 = vmatpush1.bf16.msra.mxu0 %v294
        %687 = vmatprep.subr.bf16.mxu0 0
        %688 = vmatpush1.bf16.msra.mxu0 %v293
        %689 = vmatprep.subr.bf16.mxu0 0
        %690 = vmatpush1.bf16.msra.mxu0 %v292
        %691 = vmatprep.subr.bf16.mxu0 0
        %692 = vmatpush1.bf16.msra.mxu0 %v291
        %693 = vmatprep.subr.bf16.mxu0 0
        %694 = vmatpush1.bf16.msra.mxu0 %v290
        %695 = vmatprep.subr.bf16.mxu0 0
        %696 = vmatpush1.bf16.msra.mxu0 %v289
        %697 = vmatprep.subr.bf16.mxu0 0
        %698 = vmatpush1.bf16.msra.mxu0 %v288
        %699 = vmatprep.subr.bf16.mxu0 0
        %700 = vmatpush1.bf16.msra.mxu0 %v287
        %701 = vmatprep.subr.bf16.mxu0 0
        %702 = vmatpush2.bf16.msra.mxu0 0
        %703 = vmatprep.subr.bf16.mxu0 0
        %704 = vmatpush2.bf16.msra.mxu0 0
        %705 = vmatprep.subr.bf16.mxu0 0
        %706 = vmatpush2.bf16.msra.mxu0 0
        %707 = vmatprep.subr.bf16.mxu0 0
        %708 = vmatpush2.bf16.msra.mxu0 0
        %709 = vmatprep.subr.bf16.mxu0 0
        %710 = vmatpush2.bf16.msra.mxu0 0
        %711 = vmatprep.subr.bf16.mxu0 0
        %712 = vmatpush2.bf16.msra.mxu0 0
        %713 = vmatprep.subr.bf16.mxu0 0
        %714 = vmatpush2.bf16.msra.mxu0 0
        %715 = vmatprep.subr.bf16.mxu0 0
        %716 = vmatpush2.bf16.msra.mxu0 0
        %717 = vmatprep.mubr.bf16.mxu0 0
        %718 = vmatmul.mubr.bf16.gmra.mxu0 %v684
        %v719 = vpop.f32.mrf.mxu0
        %v720 = vadd.f32 0.0, %v719
        %v721 = vpop.f32.mrf.mxu0
        %v722 = vpop.f32.mrf.mxu0
        %v723 = vpop.f32.mrf.mxu0
        %724 = vdwg.mxu0
        %v725 = vunpack.c.l.bf16 %v684
        %726 = vadd.xlane.f32.xlu0 %v725
        %v727 = vpop.xlane.xlu0 %726
        %v728 = vrcp.pop %v727
        %v729 = vmul.f32 %v720, %v728
        %v731 = vcombine.high %v729, %v729
        %v733 = vunpack.c.l.s4 1966171168
        %v734 = vunpack.c.0.s8 %v733
        %v735 = vlaneseq
        %v736 = vshrl.u32 %v735, 7
        %v737 = vsub.s32 %v734, %v736
        %v738 = vrot.slane %v729, %v737
        %v740 = vunpack.c.l.s4 1966171168
        %v741 = vunpack.c.0.s8 %v740
        %v742 = vlaneseq
        %v743 = vshrl.u32 %v742, 7
        %v744 = vsub.s32 %v741, %v743
        %v745 = vrot.slane %v731, %v744
        %v746 = vcombine.high %v738, %v738
        %v747 = vcombine.high %v745, %v745
        %v749 = vunpack.c.l.s4 1966171168
        %v750 = vunpack.c.0.s8 %v749
        %v751 = vlaneseq
        %v752 = vshrl.u32 %v751, 7
        %v753 = vsub.s32 %v750, %v752
        %v754 = vrot.slane %v738, %v753
        %v756 = vunpack.c.l.s4 1966171168
        %v757 = vunpack.c.0.s8 %v756
        %v758 = vlaneseq
        %v759 = vshrl.u32 %v758, 7
        %v760 = vsub.s32 %v757, %v759
        %v761 = vrot.slane %v745, %v760
        %v763 = vunpack.c.l.s4 1966171168
        %v764 = vunpack.c.0.s8 %v763
        %v765 = vlaneseq
        %v766 = vshrl.u32 %v765, 7
        %v767 = vsub.s32 %v764, %v766
        %v768 = vrot.slane %v746, %v767
        %v770 = vunpack.c.l.s4 1966171168
        %v771 = vunpack.c.0.s8 %v770
        %v772 = vlaneseq
        %v773 = vshrl.u32 %v772, 7
        %v774 = vsub.s32 %v771, %v773
        %v775 = vrot.slane %v747, %v774
        %v776 = vcombine.high %v754, %v754
        %v777 = vcombine.high %v761, %v761
        %v778 = vcombine.high %v768, %v768
        %v779 = vcombine.high %v775, %v775
        %vm788 = vcmask 253952
        %789 = vst.msk [vmem:[%s258] sm:$0x1] %vm788, %v754
        %790 = vst.msk [vmem:[%s258 + $0x1] sm:$0x1] %vm788, %v768
        %791 = vst.msk [vmem:[%s258 + $0x2] sm:$0x1] %vm788, %v776
        %792 = vst.msk [vmem:[%s258 + $0x3] sm:$0x1] %vm788, %v778
        %793 = vst.msk [vmem:[%s258 + $0x4] sm:$0x1] %vm788, %v761
        %794 = vst.msk [vmem:[%s258 + $0x5] sm:$0x1] %vm788, %v775
        %795 = vst.msk [vmem:[%s258 + $0x6] sm:$0x1] %vm788, %v777
        %796 = vst.msk [vmem:[%s258 + $0x7] sm:$0x1] %vm788, %v779
        %s797 = sand.u32 %s164, 1
        %s798 = scalar_lea.sflag [#allocation3], %s797
        %s799 = sand.u32 %s164, 1
        %s800 = smul.addr %s799, 8
        %s801 = scalar_lea.vmem [#allocation2], %s800
        // Predicated region
        $region45: #{tpu_custom_call.1} parent=43 // pred_check
          %p802 = pneg %p174
        $region46: #{tpu_custom_call.1} parent=43 // pred_check_branch
          %804 = sbr.rel (%p802) target = $region48
        $region47: #{tpu_custom_call.1} parent=43 // pred_region
          %s805 = smul.u32 8, %s20
          %s807 = ssub.s32 128, 128
          %808 = vsyncadd %s798, %s807
          %s809 = smul.addr %s805, 16
          %s810 = scalar_lea.hbm %s6, %s809
          %s811 = sshll.u32 %s801, 4
          %s812 = int_to_ptr.vmem [resolvable:$true] %s811
          %817 = dma.vmem_to_hbm [thread:$0]  %s812, 128, %s810, %s798, 16, 16, 1
        $region48: #{tpu_custom_call.1} parent=43 // pred_fallthru
          _
      $region44: #{tpu_custom_call.1} parent=5 // pred_fallthru
        _
      %p818 = scmp.le.s32.totalorder 2, %s15
      // Predicated region
      $region49: #{tpu_custom_call.1} parent=5 // pred_check
        %p819 = pneg %p818
      $region50: #{tpu_custom_call.1} parent=5 // pred_check_branch
        %821 = sbr.rel (%p819) target = $region52
      $region51: #{tpu_custom_call.1} parent=5 // pred_region
        %s822 = ssub.s32 %s15, 2
        // Predicated region
        $region53: #{tpu_custom_call.1} parent=51 // pred_check
          %p823 = pneg %p180
        $region54: #{tpu_custom_call.1} parent=51 // pred_check_branch
          %825 = sbr.rel (%p823) target = $region56
        $region55: #{tpu_custom_call.1} parent=51 // pred_region
          %s826 = sand.u32 %s165, 1
          %s827 = scalar_lea.sflag [#allocation3], %s826
          %s828 = sand.u32 %s165, 1
          %s829 = smul.addr %s828, 8
          %s830 = scalar_lea.vmem [#allocation2], %s829
          %831 = dma.done %s827, 128
        $region56: #{tpu_custom_call.1} parent=51 // pred_fallthru
          _
      $region52: #{tpu_custom_call.1} parent=5 // pred_fallthru
        _
    $region6: #{tpu_custom_call.1} parent=1 // loop_footer
      %s19 = sadd.s32 1, %s15
    $region7: #{tpu_custom_call.1} parent=1 // loop_footer_branch
      %14 = sbr.rel target = $region3
    $region8: #{tpu_custom_call.1} parent=1 // loop_exit
      _
    %832 = vsyncpa [#allocation3], 1
    %s833 = scalar_lea.sflag [#allocation3], 1
    %834 = vsyncpa %s833, 1

</llo_original>
